<compile_context>
chip_gen: v6e
topology: v6e:2x2x1
jax: 0.10.0
libtpu: 0.0.40
codegen_flags: <defaults>
</compile_context>

<pallas_src>
import functools

import jax
import jax.numpy as jnp
from jax.experimental import pallas as pl
from jax.experimental.pallas import tpu as pltpu

EPS = 1e-5
NEG_SLOPE = 0.01                  # PyTorch LeakyReLU default
MATMUL_DTYPE = jnp.bfloat16       # MXU operand dtype (f32 accumulation)
LANE = 128
SUBLANE = 8
TM_MAX = 512                      # 512-row tiles ~= 85% of HBM roofline
VMEM_BUDGET = 24 * 1024 * 1024    # conservative per-kernel working-set budget


def _round_up(x, m):
    return (x + m - 1) // m * m


# ----------------------------- Pallas kernels --------------------------------
def _conv_bias_kernel(p_ref, w_ref, b_ref, y_ref, *stats_refs,
                      tm, m_real, mask_rows, emit_stats):
    """One M-tile: y = patches @ W + b (f32 accum), plus BN partial sums."""
    y = jnp.dot(p_ref[...], w_ref[...], preferred_element_type=jnp.float32)
    y = y + b_ref[...]
    y_ref[...] = y
    if emit_stats:
        if mask_rows:  # zero padded rows so they don't pollute the batch stats
            row = pl.program_id(0) * tm + jax.lax.broadcasted_iota(
                jnp.int32, (tm, 1), 0)
            yv = jnp.where(row < m_real, y, 0.0)
        else:
            yv = y
        stats_ref = stats_refs[0]
        stats_ref[0:1, :] = jnp.sum(yv, axis=0, keepdims=True)          # sum
        stats_ref[1:2, :] = jnp.sum(yv * yv, axis=0, keepdims=True)     # sumsq
        stats_ref[2:SUBLANE, :] = jnp.zeros((SUBLANE - 2, yv.shape[1]),
                                            jnp.float32)


def _affine_act_kernel(y_ref, scale_ref, shift_ref, o_ref, *, act):
    """One M-tile: y*scale + shift, then activation (all f32)."""
    y = y_ref[...] * scale_ref[...] + shift_ref[...]
    if act == "leaky":
        y = jnp.where(y >= 0, y, NEG_SLOPE * y)
    elif act == "tanh":
        y = jnp.tanh(y)
    o_ref[...] = y


# ------------------------------ JAX glue --------------------------------------
def _im2col(x, kh, kw, stride, pad):
    """x: (N, C, H, W) -> patches (N*OH*OW, C*KH*KW), flattened in (C,KH,KW)."""
    n, c, h, w = x.shape
    xp = jnp.pad(x, ((0, 0), (0, 0), (pad, pad), (pad, pad)))
    oh = (h + 2 * pad - kh) // stride + 1
    ow = (w + 2 * pad - kw) // stride + 1
    cols = []
    for ki in range(kh):
        for kj in range(kw):
            cols.append(xp[:, :, ki:ki + stride * oh:stride,
                           kj:kj + stride * ow:stride])
    patches = jnp.stack(cols, axis=2)             # (N, C, KH*KW, OH, OW)
    patches = patches.transpose(0, 3, 4, 1, 2)    # (N, OH, OW, C, KH*KW)
    return patches.reshape(n * oh * ow, c * kh * kw), (n, oh, ow)


def _choose_tm(m, k_pad, c_pad):
    """Largest M-tile that keeps dbl-buffered patches + output + weights in budget."""
    bytes_per_row = 2 * k_pad * 2 + 2 * c_pad * 4   # bf16 patches x2, f32 y x2
    cap = (VMEM_BUDGET - k_pad * c_pad * 2) // bytes_per_row
    cap = max(SUBLANE, (cap // SUBLANE) * SUBLANE)
    return max(SUBLANE, min(TM_MAX, cap, _round_up(m, SUBLANE)))


def conv_block(x, w_mat, b_row, gamma_pad, beta_pad, *,
               cout, kh, kw, stride, apply_bn, act):
    """One encoder block: Conv2d(pad=1) [+ BatchNorm2d(train) + activation]."""
    n = x.shape[0]
    patches, (_, oh, ow) = _im2col(x, kh, kw, stride, pad=1)
    m, k = patches.shape
    k_pad, c_pad = w_mat.shape

    tm = _choose_tm(m, k_pad, c_pad)
    m_pad = _round_up(m, tm)
    num_tiles = m_pad // tm
    patches = jnp.pad(patches,
                      ((0, m_pad - m), (0, k_pad - k))).astype(MATMUL_DTYPE)

    # ---- pass 1: M-tiled matmul + bias (+ per-tile BN partial sums) ----
    kern = functools.partial(_conv_bias_kernel, tm=tm, m_real=m,
                             mask_rows=(m_pad != m), emit_stats=apply_bn)
    out_shapes = [jax.ShapeDtypeStruct((m_pad, c_pad), jnp.float32)]
    out_specs = [pl.BlockSpec((tm, c_pad), lambda i: (i, 0))]
    if apply_bn:
        out_shapes.append(
            jax.ShapeDtypeStruct((num_tiles * SUBLANE, c_pad), jnp.float32))
        out_specs.append(pl.BlockSpec((SUBLANE, c_pad), lambda i: (i, 0)))

    bytes_acc = (patches.size * 2 + w_mat.size * 2 + c_pad * 4
                 + m_pad * c_pad * 4
                 + (num_tiles * SUBLANE * c_pad * 4 if apply_bn else 0))
    outs = pl.pallas_call(
        kern,
        grid=(num_tiles,),
        in_specs=[pl.BlockSpec((tm, k_pad), lambda i: (i, 0)),
                  pl.BlockSpec((k_pad, c_pad), lambda i: (0, 0)),
                  pl.BlockSpec((1, c_pad), lambda i: (0, 0))],
        out_specs=out_specs,
        out_shape=out_shapes,
        compiler_params=pltpu.CompilerParams(
            dimension_semantics=("parallel",)),
        cost_estimate=pl.CostEstimate(flops=2 * m_pad * k_pad * c_pad,
                                      transcendentals=0,
                                      bytes_accessed=bytes_acc),
    )(patches, w_mat, b_row)
    y = outs[0]

    # ---- full-M BN statistics from tiny per-tile partials (biased var) ----
    if apply_bn:
        st = outs[1].reshape(num_tiles, SUBLANE, c_pad)
        mean = jnp.sum(st[:, 0, :], axis=0) / m
        var = jnp.sum(st[:, 1, :], axis=0) / m - mean * mean
        inv_std = 1.0 / jnp.sqrt(var + EPS)
        scale = (gamma_pad * inv_std).reshape(1, c_pad)
        shift = (beta_pad - mean * gamma_pad * inv_std).reshape(1, c_pad)
    else:
        scale = jnp.ones((1, c_pad), jnp.float32)
        shift = jnp.zeros((1, c_pad), jnp.float32)

    # ---- pass 2: per-channel affine + activation (skipped if pure identity) --
    if apply_bn or act != "none":
        y = pl.pallas_call(
            functools.partial(_affine_act_kernel, act=act),
            grid=(num_tiles,),
            in_specs=[pl.BlockSpec((tm, c_pad), lambda i: (i, 0)),
                      pl.BlockSpec((1, c_pad), lambda i: (0, 0)),
                      pl.BlockSpec((1, c_pad), lambda i: (0, 0))],
            out_specs=pl.BlockSpec((tm, c_pad), lambda i: (i, 0)),
            out_shape=jax.ShapeDtypeStruct((m_pad, c_pad), jnp.float32),
            input_output_aliases={0: 0},
            compiler_params=pltpu.CompilerParams(
                dimension_semantics=("parallel",)),
            cost_estimate=pl.CostEstimate(flops=3 * m_pad * c_pad,
                                          transcendentals=0,
                                          bytes_accessed=2 * m_pad * c_pad * 4),
        )(y, scale, shift)

    out = y[:m, :cout].reshape(n, oh, ow, cout)
    return out.transpose(0, 3, 1, 2)   # back to NCHW


# ------------------- one-time parameter prep + jitted forward -----------------
def prepare_params(params, config):
    """Hoist weight reshape/transpose and lane padding out of the forward path."""
    strides = config["enc_conv_stride"]
    act = config["enc_conv_act"]
    n_blocks = len(config["enc_conv_kernel_size"])
    prepped, meta = [], []
    for i, (w, b, g, bt) in enumerate(params):
        cout, cin, kh, kw = w.shape
        k = cin * kh * kw
        k_pad = _round_up(k, LANE)
        c_pad = _round_up(cout, LANE)
        w_mat = jnp.transpose(w.reshape(cout, k))                       # (K, Cout)
        w_mat = jnp.pad(w_mat, ((0, k_pad - k),
                                (0, c_pad - cout))).astype(MATMUL_DTYPE)
        b_row = jnp.pad(b, (0, c_pad - cout)).reshape(1, c_pad).astype(jnp.float32)
        g_pad = jnp.pad(g, (0, c_pad - cout)).astype(jnp.float32)
        bt_pad = jnp.pad(bt, (0, c_pad - cout)).astype(jnp.float32)
        prepped.append((w_mat, b_row, g_pad, bt_pad))
        last = i == n_blocks - 1
        meta.append(dict(cout=cout, kh=kh, kw=kw, stride=strides[i],
                         apply_bn=not last, act=("none" if last else act)))
    return prepped, meta


def make_encoder_forward(meta):
    def fwd(x, prepped):
        out = x
        for (w_mat, b_row, g_pad, bt_pad), mi in zip(prepped, meta):
            out = conv_block(out, w_mat, b_row, g_pad, bt_pad, **mi)
        return out
    return jax.jit(fwd)


# --------------------------- pure-JAX reference --------------------------------
def encoder_reference(x, params, config, matmul_dtype=jnp.float32):
    strides = config["enc_conv_stride"]
    act = config["enc_conv_act"]
    n_blocks = len(config["enc_conv_kernel_size"])
    out = x
    for i, (w, b, g, bt) in enumerate(params):
        s = strides[i]
        out = jax.lax.conv_general_dilated(
            out.astype(matmul_dtype), w.astype(matmul_dtype),
            window_strides=(s, s), padding=((1, 1), (1, 1)),
            dimension_numbers=("NCHW", "OIHW", "NCHW"),
            preferred_element_type=jnp.float32)
        out = out + b[None, :, None, None]
        if i < n_blocks - 1:
            mean = out.mean(axis=(0, 2, 3), keepdims=True)
            var = ((out - mean) ** 2).mean(axis=(0, 2, 3), keepdims=True)  # biased
            out = g[None, :, None, None] * (out - mean) / jnp.sqrt(var + EPS) \
                + bt[None, :, None, None]
            if act == "leaky":
                out = jnp.where(out >= 0, out, NEG_SLOPE * out)
            elif act == "tanh":
                out = jnp.tanh(out)
    return out


# ------------------------------- setup ------------------------------------------
def init_params(config, key):
    chans = config["enc_conv_channels"]
    ksizes = config["enc_conv_kernel_size"]
    params = []
    for i in range(len(ksizes)):
        cin, cout, k = chans[i], chans[i + 1], ksizes[i]
        key, kw_, kb_, kg_, kt_ = jax.random.split(key, 5)
        w = 0.1 * jax.random.normal(kw_, (cout, cin, k, k), jnp.float32)
        b = 0.05 * jax.random.normal(kb_, (cout,), jnp.float32)
        gamma = 1.0 + 0.1 * jax.random.normal(kg_, (cout,), jnp.float32)
        beta = 0.1 * jax.random.normal(kt_, (cout,), jnp.float32)
        params.append((w, b, gamma, beta))
    return params


if __name__ == "__main__":
    config = {
        "enc_conv_channels": [4, 8, 16, 32],
        "enc_conv_kernel_size": [3, 3, 3],
        "enc_conv_stride": [2, 2, 2],
        "enc_conv_act": "leaky",
    }

    key = jax.random.PRNGKey(0)
    key, kx = jax.random.split(key)
    x = jax.random.normal(kx, (2, 4, 16, 16), jnp.float32)   # NCHW

    params = init_params(config, key)
    prepped, meta = prepare_params(params, config)
    encoder_fwd = make_encoder_forward(meta)

    out = jax.block_until_ready(encoder_fwd(x, prepped))
    assert out.shape == (2, 32, 2, 2), out.shape

    # Check against a reference using the same (bf16 operand, f32 accum) matmul.
    ref_bf16 = jax.block_until_ready(
        encoder_reference(x, params, config, matmul_dtype=MATMUL_DTYPE))
    err = float(jnp.max(jnp.abs(out - ref_bf16)))
    assert jnp.allclose(out, ref_bf16, rtol=1e-2, atol=1e-2), err

    # Loose sanity check vs a full-f32 reference (bf16 MXU operand rounding).
    ref_f32 = jax.block_until_ready(
        encoder_reference(x, params, config, matmul_dtype=jnp.float32))
    err32 = float(jnp.max(jnp.abs(out - ref_f32)))
    assert jnp.allclose(out, ref_f32, rtol=5e-2, atol=5e-2), err32

    print("KERNEL_OK")
</pallas_src>

<mosaic_0001>
module attributes {stable_mosaic.version = 11 : i64} {
  func.func @_conv_bias_kernel(%arg0: i32, %arg1: memref<128x128xbf16, #tpu.memory_space<vmem>>, %arg2: memref<128x128xbf16, #tpu.memory_space<vmem>>, %arg3: memref<1x128xf32, #tpu.memory_space<vmem>>, %arg4: memref<128x128xf32, #tpu.memory_space<vmem>>, %arg5: memref<8x128xf32, #tpu.memory_space<vmem>>) attributes {dimension_semantics = [#tpu.dimension_semantics<parallel>], iteration_bounds = array<i64: 1>, scalar_prefetch = 0 : i64, scratch_operands = 0 : i64, tpu.core_type = #tpu.core_type<tc>, window_params = [{transform_indices = @transform_0, window_bounds = array<i64: 128, 128>}, {pipeline_mode = #tpu.pipeline_mode<synchronous>, transform_indices = @transform_1, window_bounds = array<i64: 128, 128>}, {pipeline_mode = #tpu.pipeline_mode<synchronous>, transform_indices = @transform_2, window_bounds = array<i64: 1, 128>}, {transform_indices = @transform_3, window_bounds = array<i64: 128, 128>}, {transform_indices = @transform_4, window_bounds = array<i64: 8, 128>}]} {
    %c0 = arith.constant 0 : index
    %c0_0 = arith.constant 0 : index
    %0 = vector.load %arg1[%c0, %c0_0] : memref<128x128xbf16, #tpu.memory_space<vmem>>, vector<128x128xbf16>
    %c0_1 = arith.constant 0 : index
    %c0_2 = arith.constant 0 : index
    %1 = vector.load %arg2[%c0_1, %c0_2] : memref<128x128xbf16, #tpu.memory_space<vmem>>, vector<128x128xbf16>
    %cst = arith.constant dense<0.000000e+00> : vector<128x128xf32>
    %2 = tpu.matmul %0, %1, %cst {dimension_numbers = #tpu.dot_dimension_numbers<[1], [0], [0], [1], [0, 0, 1, 1], [], []>} : vector<128x128xbf16>, vector<128x128xbf16>, vector<128x128xf32> -> vector<128x128xf32>
    %c0_3 = arith.constant 0 : index
    %c0_4 = arith.constant 0 : index
    %3 = vector.load %arg3[%c0_3, %c0_4] : memref<1x128xf32, #tpu.memory_space<vmem>>, vector<1x128xf32>
    %4 = vector.broadcast %3 : vector<1x128xf32> to vector<128x128xf32>
    %5 = arith.addf %2, %4 : vector<128x128xf32>
    %c0_5 = arith.constant 0 : index
    %c0_6 = arith.constant 0 : index
    %6 = vector.load %arg4[%c0_5, %c0_6] : memref<128x128xf32, #tpu.memory_space<vmem>>, vector<128x128xf32>
    tpu.vector_store %arg4[%c0_5, %c0_6], %5 {strides = array<i32>} : memref<128x128xf32, #tpu.memory_space<vmem>>, vector<128x128xf32>,
    %cst_7 = arith.constant dense<0.000000e+00> : vector<128xf32>
    %7 = vector.multi_reduction <add>, %5, %cst_7 [0] : vector<128x128xf32> to vector<128xf32>
    %8 = vector.shape_cast %7 : vector<128xf32> to vector<1x128xf32>
    %c0_8 = arith.constant 0 : index
    %c0_9 = arith.constant 0 : index
    %9 = vector.load %arg5[%c0_8, %c0_9] : memref<8x128xf32, #tpu.memory_space<vmem>>, vector<1x128xf32>
    tpu.vector_store %arg5[%c0_8, %c0_9], %8 {strides = array<i32>} : memref<8x128xf32, #tpu.memory_space<vmem>>, vector<1x128xf32>,
    %10 = arith.mulf %5, %5 : vector<128x128xf32>
    %cst_10 = arith.constant dense<0.000000e+00> : vector<128xf32>
    %11 = vector.multi_reduction <add>, %10, %cst_10 [0] : vector<128x128xf32> to vector<128xf32>
    %12 = vector.shape_cast %11 : vector<128xf32> to vector<1x128xf32>
    %c1 = arith.constant 1 : index
    %c0_11 = arith.constant 0 : index
    %13 = vector.load %arg5[%c1, %c0_11] : memref<8x128xf32, #tpu.memory_space<vmem>>, vector<1x128xf32>
    tpu.vector_store %arg5[%c1, %c0_11], %12 {strides = array<i32>} : memref<8x128xf32, #tpu.memory_space<vmem>>, vector<1x128xf32>,
    %cst_12 = arith.constant 0.000000e+00 : f32
    %14 = vector.broadcast %cst_12 : f32 to vector<6x128xf32>
    %c2 = arith.constant 2 : index
    %c0_13 = arith.constant 0 : index
    %15 = vector.load %arg5[%c2, %c0_13] : memref<8x128xf32, #tpu.memory_space<vmem>>, vector<6x128xf32>
    tpu.vector_store %arg5[%c2, %c0_13], %14 {strides = array<i32>} : memref<8x128xf32, #tpu.memory_space<vmem>>, vector<6x128xf32>,
    return
  }
  func.func @transform_0(%arg0: i32) -> (i32, i32) {
    %c0_i32 = arith.constant 0 : i32
    %c0_i32_0 = arith.constant 0 : i32
    return %arg0, %c0_i32 : i32, i32
  }
  func.func @transform_1(%arg0: i32) -> (i32, i32) {
    %c0_i32 = arith.constant 0 : i32
    %c0_i32_0 = arith.constant 0 : i32
    %c0_i32_1 = arith.constant 0 : i32
    return %c0_i32, %c0_i32_0 : i32, i32
  }
  func.func @transform_2(%arg0: i32) -> (i32, i32) {
    %c0_i32 = arith.constant 0 : i32
    %c0_i32_0 = arith.constant 0 : i32
    %c0_i32_1 = arith.constant 0 : i32
    return %c0_i32, %c0_i32_0 : i32, i32
  }
  func.func @transform_3(%arg0: i32) -> (i32, i32) {
    %c0_i32 = arith.constant 0 : i32
    %c0_i32_0 = arith.constant 0 : i32
    return %arg0, %c0_i32 : i32, i32
  }
  func.func @transform_4(%arg0: i32) -> (i32, i32) {
    %c0_i32 = arith.constant 0 : i32
    %c0_i32_0 = arith.constant 0 : i32
    return %arg0, %c0_i32 : i32, i32
  }
}

module attributes {stable_mosaic.version = 11 : i64} {
  func.func @_affine_act_kernel(%arg0: i32, %arg1: memref<128x128xf32, #tpu.memory_space<vmem>>, %arg2: memref<1x128xf32, #tpu.memory_space<vmem>>, %arg3: memref<1x128xf32, #tpu.memory_space<vmem>>, %arg4: memref<128x128xf32, #tpu.memory_space<vmem>>) attributes {dimension_semantics = [#tpu.dimension_semantics<parallel>], iteration_bounds = array<i64: 1>, scalar_prefetch = 0 : i64, scratch_operands = 0 : i64, tpu.core_type = #tpu.core_type<tc>, window_params = [{transform_indices = @transform_0, window_bounds = array<i64: 128, 128>}, {pipeline_mode = #tpu.pipeline_mode<synchronous>, transform_indices = @transform_1, window_bounds = array<i64: 1, 128>}, {pipeline_mode = #tpu.pipeline_mode<synchronous>, transform_indices = @transform_2, window_bounds = array<i64: 1, 128>}, {transform_indices = @transform_3, window_bounds = array<i64: 128, 128>}]} {
    %c0 = arith.constant 0 : index
    %c0_0 = arith.constant 0 : index
    %0 = vector.load %arg1[%c0, %c0_0] : memref<128x128xf32, #tpu.memory_space<vmem>>, vector<128x128xf32>
    %c0_1 = arith.constant 0 : index
    %c0_2 = arith.constant 0 : index
    %1 = vector.load %arg2[%c0_1, %c0_2] : memref<1x128xf32, #tpu.memory_space<vmem>>, vector<1x128xf32>
    %2 = vector.broadcast %1 : vector<1x128xf32> to vector<128x128xf32>
    %3 = arith.mulf %0, %2 : vector<128x128xf32>
    %c0_3 = arith.constant 0 : index
    %c0_4 = arith.constant 0 : index
    %4 = vector.load %arg3[%c0_3, %c0_4] : memref<1x128xf32, #tpu.memory_space<vmem>>, vector<1x128xf32>
    %5 = vector.broadcast %4 : vector<1x128xf32> to vector<128x128xf32>
    %6 = arith.addf %3, %5 : vector<128x128xf32>
    %cst = arith.constant 0.000000e+00 : f32
    %7 = vector.broadcast %cst : f32 to vector<128x128xf32>
    %8 = arith.cmpf oge, %6, %7 : vector<128x128xf32>
    %cst_5 = arith.constant 0.00999999977 : f32
    %9 = vector.broadcast %cst_5 : f32 to vector<128x128xf32>
    %10 = arith.mulf %9, %6 : vector<128x128xf32>
    %11 = arith.select %8, %6, %10 : vector<128x128xi1>, vector<128x128xf32>
    %c0_6 = arith.constant 0 : index
    %c0_7 = arith.constant 0 : index
    %12 = vector.load %arg4[%c0_6, %c0_7] : memref<128x128xf32, #tpu.memory_space<vmem>>, vector<128x128xf32>
    tpu.vector_store %arg4[%c0_6, %c0_7], %11 {strides = array<i32>} : memref<128x128xf32, #tpu.memory_space<vmem>>, vector<128x128xf32>,
    return
  }
  func.func @transform_0(%arg0: i32) -> (i32, i32) {
    %c0_i32 = arith.constant 0 : i32
    %c0_i32_0 = arith.constant 0 : i32
    return %arg0, %c0_i32 : i32, i32
  }
  func.func @transform_1(%arg0: i32) -> (i32, i32) {
    %c0_i32 = arith.constant 0 : i32
    %c0_i32_0 = arith.constant 0 : i32
    %c0_i32_1 = arith.constant 0 : i32
    return %c0_i32, %c0_i32_0 : i32, i32
  }
  func.func @transform_2(%arg0: i32) -> (i32, i32) {
    %c0_i32 = arith.constant 0 : i32
    %c0_i32_0 = arith.constant 0 : i32
    %c0_i32_1 = arith.constant 0 : i32
    return %c0_i32, %c0_i32_0 : i32, i32
  }
  func.func @transform_3(%arg0: i32) -> (i32, i32) {
    %c0_i32 = arith.constant 0 : i32
    %c0_i32_0 = arith.constant 0 : i32
    return %arg0, %c0_i32 : i32, i32
  }
}

module attributes {stable_mosaic.version = 11 : i64} {
  func.func @_conv_bias_kernel(%arg0: i32, %arg1: memref<32x128xbf16, #tpu.memory_space<vmem>>, %arg2: memref<128x128xbf16, #tpu.memory_space<vmem>>, %arg3: memref<1x128xf32, #tpu.memory_space<vmem>>, %arg4: memref<32x128xf32, #tpu.memory_space<vmem>>, %arg5: memref<8x128xf32, #tpu.memory_space<vmem>>) attributes {dimension_semantics = [#tpu.dimension_semantics<parallel>], iteration_bounds = array<i64: 1>, scalar_prefetch = 0 : i64, scratch_operands = 0 : i64, tpu.core_type = #tpu.core_type<tc>, window_params = [{transform_indices = @transform_0, window_bounds = array<i64: 32, 128>}, {pipeline_mode = #tpu.pipeline_mode<synchronous>, transform_indices = @transform_1, window_bounds = array<i64: 128, 128>}, {pipeline_mode = #tpu.pipeline_mode<synchronous>, transform_indices = @transform_2, window_bounds = array<i64: 1, 128>}, {transform_indices = @transform_3, window_bounds = array<i64: 32, 128>}, {transform_indices = @transform_4, window_bounds = array<i64: 8, 128>}]} {
    %c0 = arith.constant 0 : index
    %c0_0 = arith.constant 0 : index
    %0 = vector.load %arg1[%c0, %c0_0] : memref<32x128xbf16, #tpu.memory_space<vmem>>, vector<32x128xbf16>
    %c0_1 = arith.constant 0 : index
    %c0_2 = arith.constant 0 : index
    %1 = vector.load %arg2[%c0_1, %c0_2] : memref<128x128xbf16, #tpu.memory_space<vmem>>, vector<128x128xbf16>
    %cst = arith.constant dense<0.000000e+00> : vector<32x128xf32>
    %2 = tpu.matmul %0, %1, %cst {dimension_numbers = #tpu.dot_dimension_numbers<[1], [0], [0], [1], [0, 0, 1, 1], [], []>} : vector<32x128xbf16>, vector<128x128xbf16>, vector<32x128xf32> -> vector<32x128xf32>
    %c0_3 = arith.constant 0 : index
    %c0_4 = arith.constant 0 : index
    %3 = vector.load %arg3[%c0_3, %c0_4] : memref<1x128xf32, #tpu.memory_space<vmem>>, vector<1x128xf32>
    %4 = vector.broadcast %3 : vector<1x128xf32> to vector<32x128xf32>
    %5 = arith.addf %2, %4 : vector<32x128xf32>
    %c0_5 = arith.constant 0 : index
    %c0_6 = arith.constant 0 : index
    %6 = vector.load %arg4[%c0_5, %c0_6] : memref<32x128xf32, #tpu.memory_space<vmem>>, vector<32x128xf32>
    tpu.vector_store %arg4[%c0_5, %c0_6], %5 {strides = array<i32>} : memref<32x128xf32, #tpu.memory_space<vmem>>, vector<32x128xf32>,
    %cst_7 = arith.constant dense<0.000000e+00> : vector<128xf32>
    %7 = vector.multi_reduction <add>, %5, %cst_7 [0] : vector<32x128xf32> to vector<128xf32>
    %8 = vector.shape_cast %7 : vector<128xf32> to vector<1x128xf32>
    %c0_8 = arith.constant 0 : index
    %c0_9 = arith.constant 0 : index
    %9 = vector.load %arg5[%c0_8, %c0_9] : memref<8x128xf32, #tpu.memory_space<vmem>>, vector<1x128xf32>
    tpu.vector_store %arg5[%c0_8, %c0_9], %8 {strides = array<i32>} : memref<8x128xf32, #tpu.memory_space<vmem>>, vector<1x128xf32>,
    %10 = arith.mulf %5, %5 : vector<32x128xf32>
    %cst_10 = arith.constant dense<0.000000e+00> : vector<128xf32>
    %11 = vector.multi_reduction <add>, %10, %cst_10 [0] : vector<32x128xf32> to vector<128xf32>
    %12 = vector.shape_cast %11 : vector<128xf32> to vector<1x128xf32>
    %c1 = arith.constant 1 : index
    %c0_11 = arith.constant 0 : index
    %13 = vector.load %arg5[%c1, %c0_11] : memref<8x128xf32, #tpu.memory_space<vmem>>, vector<1x128xf32>
    tpu.vector_store %arg5[%c1, %c0_11], %12 {strides = array<i32>} : memref<8x128xf32, #tpu.memory_space<vmem>>, vector<1x128xf32>,
    %cst_12 = arith.constant 0.000000e+00 : f32
    %14 = vector.broadcast %cst_12 : f32 to vector<6x128xf32>
    %c2 = arith.constant 2 : index
    %c0_13 = arith.constant 0 : index
    %15 = vector.load %arg5[%c2, %c0_13] : memref<8x128xf32, #tpu.memory_space<vmem>>, vector<6x128xf32>
    tpu.vector_store %arg5[%c2, %c0_13], %14 {strides = array<i32>} : memref<8x128xf32, #tpu.memory_space<vmem>>, vector<6x128xf32>,
    return
  }
  func.func @transform_0(%arg0: i32) -> (i32, i32) {
    %c0_i32 = arith.constant 0 : i32
    %c0_i32_0 = arith.constant 0 : i32
    return %arg0, %c0_i32 : i32, i32
  }
  func.func @transform_1(%arg0: i32) -> (i32, i32) {
    %c0_i32 = arith.constant 0 : i32
    %c0_i32_0 = arith.constant 0 : i32
    %c0_i32_1 = arith.constant 0 : i32
    return %c0_i32, %c0_i32_0 : i32, i32
  }
  func.func @transform_2(%arg0: i32) -> (i32, i32) {
    %c0_i32 = arith.constant 0 : i32
    %c0_i32_0 = arith.constant 0 : i32
    %c0_i32_1 = arith.constant 0 : i32
    return %c0_i32, %c0_i32_0 : i32, i32
  }
  func.func @transform_3(%arg0: i32) -> (i32, i32) {
    %c0_i32 = arith.constant 0 : i32
    %c0_i32_0 = arith.constant 0 : i32
    return %arg0, %c0_i32 : i32, i32
  }
  func.func @transform_4(%arg0: i32) -> (i32, i32) {
    %c0_i32 = arith.constant 0 : i32
    %c0_i32_0 = arith.constant 0 : i32
    return %arg0, %c0_i32 : i32, i32
  }
}

module attributes {stable_mosaic.version = 11 : i64} {
  func.func @_affine_act_kernel(%arg0: i32, %arg1: memref<32x128xf32, #tpu.memory_space<vmem>>, %arg2: memref<1x128xf32, #tpu.memory_space<vmem>>, %arg3: memref<1x128xf32, #tpu.memory_space<vmem>>, %arg4: memref<32x128xf32, #tpu.memory_space<vmem>>) attributes {dimension_semantics = [#tpu.dimension_semantics<parallel>], iteration_bounds = array<i64: 1>, scalar_prefetch = 0 : i64, scratch_operands = 0 : i64, tpu.core_type = #tpu.core_type<tc>, window_params = [{transform_indices = @transform_0, window_bounds = array<i64: 32, 128>}, {pipeline_mode = #tpu.pipeline_mode<synchronous>, transform_indices = @transform_1, window_bounds = array<i64: 1, 128>}, {pipeline_mode = #tpu.pipeline_mode<synchronous>, transform_indices = @transform_2, window_bounds = array<i64: 1, 128>}, {transform_indices = @transform_3, window_bounds = array<i64: 32, 128>}]} {
    %c0 = arith.constant 0 : index
    %c0_0 = arith.constant 0 : index
    %0 = vector.load %arg1[%c0, %c0_0] : memref<32x128xf32, #tpu.memory_space<vmem>>, vector<32x128xf32>
    %c0_1 = arith.constant 0 : index
    %c0_2 = arith.constant 0 : index
    %1 = vector.load %arg2[%c0_1, %c0_2] : memref<1x128xf32, #tpu.memory_space<vmem>>, vector<1x128xf32>
    %2 = vector.broadcast %1 : vector<1x128xf32> to vector<32x128xf32>
    %3 = arith.mulf %0, %2 : vector<32x128xf32>
    %c0_3 = arith.constant 0 : index
    %c0_4 = arith.constant 0 : index
    %4 = vector.load %arg3[%c0_3, %c0_4] : memref<1x128xf32, #tpu.memory_space<vmem>>, vector<1x128xf32>
    %5 = vector.broadcast %4 : vector<1x128xf32> to vector<32x128xf32>
    %6 = arith.addf %3, %5 : vector<32x128xf32>
    %cst = arith.constant 0.000000e+00 : f32
    %7 = vector.broadcast %cst : f32 to vector<32x128xf32>
    %8 = arith.cmpf oge, %6, %7 : vector<32x128xf32>
    %cst_5 = arith.constant 0.00999999977 : f32
    %9 = vector.broadcast %cst_5 : f32 to vector<32x128xf32>
    %10 = arith.mulf %9, %6 : vector<32x128xf32>
    %11 = arith.select %8, %6, %10 : vector<32x128xi1>, vector<32x128xf32>
    %c0_6 = arith.constant 0 : index
    %c0_7 = arith.constant 0 : index
    %12 = vector.load %arg4[%c0_6, %c0_7] : memref<32x128xf32, #tpu.memory_space<vmem>>, vector<32x128xf32>
    tpu.vector_store %arg4[%c0_6, %c0_7], %11 {strides = array<i32>} : memref<32x128xf32, #tpu.memory_space<vmem>>, vector<32x128xf32>,
    return
  }
  func.func @transform_0(%arg0: i32) -> (i32, i32) {
    %c0_i32 = arith.constant 0 : i32
    %c0_i32_0 = arith.constant 0 : i32
    return %arg0, %c0_i32 : i32, i32
  }
  func.func @transform_1(%arg0: i32) -> (i32, i32) {
    %c0_i32 = arith.constant 0 : i32
    %c0_i32_0 = arith.constant 0 : i32
    %c0_i32_1 = arith.constant 0 : i32
    return %c0_i32, %c0_i32_0 : i32, i32
  }
  func.func @transform_2(%arg0: i32) -> (i32, i32) {
    %c0_i32 = arith.constant 0 : i32
    %c0_i32_0 = arith.constant 0 : i32
    %c0_i32_1 = arith.constant 0 : i32
    return %c0_i32, %c0_i32_0 : i32, i32
  }
  func.func @transform_3(%arg0: i32) -> (i32, i32) {
    %c0_i32 = arith.constant 0 : i32
    %c0_i32_0 = arith.constant 0 : i32
    return %arg0, %c0_i32 : i32, i32
  }
}

module attributes {stable_mosaic.version = 11 : i64} {
  func.func @_conv_bias_kernel(%arg0: i32, %arg1: memref<8x256xbf16, #tpu.memory_space<vmem>>, %arg2: memref<256x128xbf16, #tpu.memory_space<vmem>>, %arg3: memref<1x128xf32, #tpu.memory_space<vmem>>, %arg4: memref<8x128xf32, #tpu.memory_space<vmem>>) attributes {dimension_semantics = [#tpu.dimension_semantics<parallel>], iteration_bounds = array<i64: 1>, scalar_prefetch = 0 : i64, scratch_operands = 0 : i64, tpu.core_type = #tpu.core_type<tc>, window_params = [{transform_indices = @transform_0, window_bounds = array<i64: 8, 256>}, {pipeline_mode = #tpu.pipeline_mode<synchronous>, transform_indices = @transform_1, window_bounds = array<i64: 256, 128>}, {pipeline_mode = #tpu.pipeline_mode<synchronous>, transform_indices = @transform_2, window_bounds = array<i64: 1, 128>}, {transform_indices = @transform_3, window_bounds = array<i64: 8, 128>}]} {
    %c0 = arith.constant 0 : index
    %c0_0 = arith.constant 0 : index
    %0 = vector.load %arg1[%c0, %c0_0] : memref<8x256xbf16, #tpu.memory_space<vmem>>, vector<8x256xbf16>
    %c0_1 = arith.constant 0 : index
    %c0_2 = arith.constant 0 : index
    %1 = vector.load %arg2[%c0_1, %c0_2] : memref<256x128xbf16, #tpu.memory_space<vmem>>, vector<256x128xbf16>
    %cst = arith.constant dense<0.000000e+00> : vector<8x128xf32>
    %2 = tpu.matmul %0, %1, %cst {dimension_numbers = #tpu.dot_dimension_numbers<[1], [0], [0], [1], [0, 0, 1, 1], [], []>} : vector<8x256xbf16>, vector<256x128xbf16>, vector<8x128xf32> -> vector<8x128xf32>
    %c0_3 = arith.constant 0 : index
    %c0_4 = arith.constant 0 : index
    %3 = vector.load %arg3[%c0_3, %c0_4] : memref<1x128xf32, #tpu.memory_space<vmem>>, vector<1x128xf32>
    %4 = vector.broadcast %3 : vector<1x128xf32> to vector<8x128xf32>
    %5 = arith.addf %2, %4 : vector<8x128xf32>
    %c0_5 = arith.constant 0 : index
    %c0_6 = arith.constant 0 : index
    %6 = vector.load %arg4[%c0_5, %c0_6] : memref<8x128xf32, #tpu.memory_space<vmem>>, vector<8x128xf32>
    tpu.vector_store %arg4[%c0_5, %c0_6], %5 {strides = array<i32>} : memref<8x128xf32, #tpu.memory_space<vmem>>, vector<8x128xf32>,
    return
  }
  func.func @transform_0(%arg0: i32) -> (i32, i32) {
    %c0_i32 = arith.constant 0 : i32
    %c0_i32_0 = arith.constant 0 : i32
    return %arg0, %c0_i32 : i32, i32
  }
  func.func @transform_1(%arg0: i32) -> (i32, i32) {
    %c0_i32 = arith.constant 0 : i32
    %c0_i32_0 = arith.constant 0 : i32
    %c0_i32_1 = arith.constant 0 : i32
    return %c0_i32, %c0_i32_0 : i32, i32
  }
  func.func @transform_2(%arg0: i32) -> (i32, i32) {
    %c0_i32 = arith.constant 0 : i32
    %c0_i32_0 = arith.constant 0 : i32
    %c0_i32_1 = arith.constant 0 : i32
    return %c0_i32, %c0_i32_0 : i32, i32
  }
  func.func @transform_3(%arg0: i32) -> (i32, i32) {
    %c0_i32 = arith.constant 0 : i32
    %c0_i32_0 = arith.constant 0 : i32
    return %arg0, %c0_i32 : i32, i32
  }
}

</mosaic_0001>

<llo_original>
// kernel: fwd.5
$region0: #{fwd.5}
  #allocation0 [shape = 'u32[]', space=smem, size = 0x4, offset = 0x4, fixed_abs, tag = 'smem constant byte address 0x4 - core index']
  #allocation1 [shape = 'u32[144,128]{1,0:T(1,128)}', space=vmem, size = 0x12000, scoped, tag = 'internal scratch']
  %s0 = inlined_call_operand.vmem [shape: bf16[128,128], index: 0, kind: input, shape index: {}]
  %s1 = inlined_call_operand.vmem [shape: bf16[128,128], index: 1, kind: input, shape index: {}]
  %s2 = inlined_call_operand.vmem [shape: f32[1,128], index: 2, kind: input, shape index: {}]
  %s3 = inlined_call_operand.vmem [shape: f32[128,128], index: 3, kind: output, shape index: {0}]
  %s4 = inlined_call_operand.vmem [shape: f32[8,128], index: 4, kind: output, shape index: {1}]
  %5 = xla_tuple %s3, %s4
  %s6 = sld [smem:[#allocation0]]
  $region30: #{fwd.5} parent=0
    _
  %s8 = ssub.s32 1, %s6
  %s9 = scalar_select 0, %s8, %s6
  // Predicated region
  $region2: #{fwd.5} parent=0 // pred_check
    _
  $region3: #{fwd.5} parent=0 // pred_check_branch
    %11 = sbr.rel (0) target = $region5
  $region4: #{fwd.5} parent=0 // pred_region
    _
  $region5: #{fwd.5} parent=0 // pred_fallthru
    _
  // Predicated region
  $region6: #{fwd.5} parent=0 // pred_check
    _
  $region7: #{fwd.5} parent=0 // pred_check_branch
    %13 = sbr.rel (0) target = $region9
  $region8: #{fwd.5} parent=0 // pred_region
    _
  $region9: #{fwd.5} parent=0 // pred_fallthru
    _
  // Predicated region
  $region10: #{fwd.5} parent=0 // pred_check
    _
  $region11: #{fwd.5} parent=0 // pred_check_branch
    %15 = sbr.rel (0) target = $region13
  $region12: #{fwd.5} parent=0 // pred_region
    _
  $region13: #{fwd.5} parent=0 // pred_fallthru
    _
  %v17 = vld [vmem:[%s0] sm:$0xf]
  %v18 = vld [vmem:[%s0 + $0x4] sm:$0xf]
  %v19 = vld [vmem:[%s0 + $0x8] sm:$0xf]
  %v20 = vld [vmem:[%s0 + $0xc] sm:$0xf]
  %v21 = vld [vmem:[%s0 + $0x10] sm:$0xf]
  %v22 = vld [vmem:[%s0 + $0x14] sm:$0xf]
  %v23 = vld [vmem:[%s0 + $0x18] sm:$0xf]
  %v24 = vld [vmem:[%s0 + $0x1c] sm:$0xf]
  %v25 = vld [vmem:[%s0 + $0x20] sm:$0xf]
  %v26 = vld [vmem:[%s0 + $0x24] sm:$0xf]
  %v27 = vld [vmem:[%s0 + $0x28] sm:$0xf]
  %v28 = vld [vmem:[%s0 + $0x2c] sm:$0xf]
  %v29 = vld [vmem:[%s0 + $0x30] sm:$0xf]
  %v30 = vld [vmem:[%s0 + $0x34] sm:$0xf]
  %v31 = vld [vmem:[%s0 + $0x38] sm:$0xf]
  %v32 = vld [vmem:[%s0 + $0x3c] sm:$0xf]
  %v33 = vld [vmem:[%s1] sm:$0xf]
  %v34 = vld [vmem:[%s1 + $0x4] sm:$0xf]
  %v35 = vld [vmem:[%s1 + $0x8] sm:$0xf]
  %v36 = vld [vmem:[%s1 + $0xc] sm:$0xf]
  %v37 = vld [vmem:[%s1 + $0x10] sm:$0xf]
  %v38 = vld [vmem:[%s1 + $0x14] sm:$0xf]
  %v39 = vld [vmem:[%s1 + $0x18] sm:$0xf]
  %v40 = vld [vmem:[%s1 + $0x1c] sm:$0xf]
  %v41 = vld [vmem:[%s1 + $0x20] sm:$0xf]
  %v42 = vld [vmem:[%s1 + $0x24] sm:$0xf]
  %v43 = vld [vmem:[%s1 + $0x28] sm:$0xf]
  %v44 = vld [vmem:[%s1 + $0x2c] sm:$0xf]
  %v45 = vld [vmem:[%s1 + $0x30] sm:$0xf]
  %v46 = vld [vmem:[%s1 + $0x34] sm:$0xf]
  %v47 = vld [vmem:[%s1 + $0x38] sm:$0xf]
  %v48 = vld [vmem:[%s1 + $0x3c] sm:$0xf]
  %v49 = vld [vmem:[%s2] sm:$0x1]
  %v51 = vlaneseq
  %v52 = vshrl.u32 %v51, 7
  %v53 = vsub.s32 0, %v52
  %v54 = vrot.slane %v49, %v53
  %v72 = vunpack.c.l.b16 %v17
  %v73 = vunpack.c.l.b16 %v18
  %v74 = vunpack.c.l.b16 %v19
  %v75 = vunpack.c.l.b16 %v20
  %v76 = vunpack.c.l.b16 %v21
  %v77 = vunpack.c.l.b16 %v22
  %v78 = vunpack.c.l.b16 %v23
  %v79 = vunpack.c.l.b16 %v24
  %v80 = vunpack.c.l.b16 %v25
  %v81 = vunpack.c.l.b16 %v26
  %v82 = vunpack.c.l.b16 %v27
  %v83 = vunpack.c.l.b16 %v28
  %v84 = vunpack.c.l.b16 %v29
  %v85 = vunpack.c.l.b16 %v30
  %v86 = vunpack.c.l.b16 %v31
  %v87 = vunpack.c.l.b16 %v32
  %v88 = vpack.c.b16 %v73, %v72
  %v89 = vpack.c.b16 %v75, %v74
  %v90 = vpack.c.b16 %v77, %v76
  %v91 = vpack.c.b16 %v79, %v78
  %v92 = vpack.c.b16 %v81, %v80
  %v93 = vpack.c.b16 %v83, %v82
  %v94 = vpack.c.b16 %v85, %v84
  %v95 = vpack.c.b16 %v87, %v86
  %v120 = vunpack.c.l.b16 %v33
  %v121 = vunpack.c.l.b16 %v34
  %v122 = vunpack.c.l.b16 %v35
  %v123 = vunpack.c.l.b16 %v36
  %v124 = vunpack.c.l.b16 %v37
  %v125 = vunpack.c.l.b16 %v38
  %v126 = vunpack.c.l.b16 %v39
  %v127 = vunpack.c.l.b16 %v40
  %v128 = vunpack.c.l.b16 %v41
  %v129 = vunpack.c.l.b16 %v42
  %v130 = vunpack.c.l.b16 %v43
  %v131 = vunpack.c.l.b16 %v44
  %v132 = vunpack.c.l.b16 %v45
  %v133 = vunpack.c.l.b16 %v46
  %v134 = vunpack.c.l.b16 %v47
  %v135 = vunpack.c.l.b16 %v48
  %v136 = vpack.c.b16 %v121, %v120
  %v137 = vpack.c.b16 %v123, %v122
  %v138 = vpack.c.b16 %v125, %v124
  %v139 = vpack.c.b16 %v127, %v126
  %v140 = vpack.c.b16 %v129, %v128
  %v141 = vpack.c.b16 %v131, %v130
  %v142 = vpack.c.b16 %v133, %v132
  %v143 = vpack.c.b16 %v135, %v134
  %152 = vmatprep.subr.bf16.mxu0 0
  %153 = vmatpush1.bf16.msra.mxu0 %v143
  %154 = vmatprep.subr.bf16.mxu0 0
  %155 = vmatpush1.bf16.msra.mxu0 %v142
  %156 = vmatprep.subr.bf16.mxu0 0
  %157 = vmatpush1.bf16.msra.mxu0 %v141
  %158 = vmatprep.subr.bf16.mxu0 0
  %159 = vmatpush1.bf16.msra.mxu0 %v140
  %160 = vmatprep.subr.bf16.mxu0 0
  %161 = vmatpush1.bf16.msra.mxu0 %v139
  %162 = vmatprep.subr.bf16.mxu0 0
  %163 = vmatpush1.bf16.msra.mxu0 %v138
  %164 = vmatprep.subr.bf16.mxu0 0
  %165 = vmatpush1.bf16.msra.mxu0 %v137
  %166 = vmatprep.subr.bf16.mxu0 0
  %167 = vmatpush1.bf16.msra.mxu0 %v136
  %168 = vmatprep.subr.bf16.mxu0 0
  %169 = vmatpush2.bf16.msra.mxu0 0
  %170 = vmatprep.subr.bf16.mxu0 0
  %171 = vmatpush2.bf16.msra.mxu0 0
  %172 = vmatprep.subr.bf16.mxu0 0
  %173 = vmatpush2.bf16.msra.mxu0 0
  %174 = vmatprep.subr.bf16.mxu0 0
  %175 = vmatpush2.bf16.msra.mxu0 0
  %176 = vmatprep.subr.bf16.mxu0 0
  %177 = vmatpush2.bf16.msra.mxu0 0
  %178 = vmatprep.subr.bf16.mxu0 0
  %179 = vmatpush2.bf16.msra.mxu0 0
  %180 = vmatprep.subr.bf16.mxu0 0
  %181 = vmatpush2.bf16.msra.mxu0 0
  %182 = vmatprep.subr.bf16.mxu0 0
  %183 = vmatpush2.bf16.msra.mxu0 0
  %184 = vmatprep.mubr.bf16.mxu0 0
  %185 = vmatmul.mubr.bf16.gmra.mxu0 %v88
  %v186 = vpop.f32.mrf.mxu0
  %v187 = vadd.f32 %v54, %v186
  %v188 = vpop.f32.mrf.mxu0
  %v189 = vpop.f32.mrf.mxu0
  %v190 = vadd.f32 %v54, %v189
  %v191 = vpop.f32.mrf.mxu0
  %192 = vmatprep.mubr.bf16.mxu0 0
  %193 = vmatmul.mubr.bf16.gmra.mxu0 %v89
  %v194 = vpop.f32.mrf.mxu0
  %v195 = vadd.f32 %v54, %v194
  %v196 = vpop.f32.mrf.mxu0
  %v197 = vpop.f32.mrf.mxu0
  %v198 = vadd.f32 %v54, %v197
  %v199 = vpop.f32.mrf.mxu0
  %200 = vmatprep.mubr.bf16.mxu0 0
  %201 = vmatmul.mubr.bf16.gmra.mxu0 %v90
  %v202 = vpop.f32.mrf.mxu0
  %v203 = vadd.f32 %v54, %v202
  %v204 = vpop.f32.mrf.mxu0
  %v205 = vpop.f32.mrf.mxu0
  %v206 = vadd.f32 %v54, %v205
  %v207 = vpop.f32.mrf.mxu0
  %208 = vmatprep.mubr.bf16.mxu0 0
  %209 = vmatmul.mubr.bf16.gmra.mxu0 %v91
  %v210 = vpop.f32.mrf.mxu0
  %v211 = vadd.f32 %v54, %v210
  %v212 = vpop.f32.mrf.mxu0
  %v213 = vpop.f32.mrf.mxu0
  %v214 = vadd.f32 %v54, %v213
  %v215 = vpop.f32.mrf.mxu0
  %216 = vmatprep.mubr.bf16.mxu0 0
  %217 = vmatmul.mubr.bf16.gmra.mxu0 %v92
  %v218 = vpop.f32.mrf.mxu0
  %v219 = vadd.f32 %v54, %v218
  %v220 = vpop.f32.mrf.mxu0
  %v221 = vpop.f32.mrf.mxu0
  %v222 = vadd.f32 %v54, %v221
  %v223 = vpop.f32.mrf.mxu0
  %224 = vmatprep.mubr.bf16.mxu0 0
  %225 = vmatmul.mubr.bf16.gmra.mxu0 %v93
  %v226 = vpop.f32.mrf.mxu0
  %v227 = vadd.f32 %v54, %v226
  %v228 = vpop.f32.mrf.mxu0
  %v229 = vpop.f32.mrf.mxu0
  %v230 = vadd.f32 %v54, %v229
  %v231 = vpop.f32.mrf.mxu0
  %232 = vmatprep.mubr.bf16.mxu0 0
  %233 = vmatmul.mubr.bf16.gmra.mxu0 %v94
  %v234 = vpop.f32.mrf.mxu0
  %v235 = vadd.f32 %v54, %v234
  %v236 = vpop.f32.mrf.mxu0
  %v237 = vpop.f32.mrf.mxu0
  %v238 = vadd.f32 %v54, %v237
  %v239 = vpop.f32.mrf.mxu0
  %240 = vmatprep.mubr.bf16.mxu0 0
  %241 = vmatmul.mubr.bf16.gmra.mxu0 %v95
  %v242 = vpop.f32.mrf.mxu0
  %v243 = vadd.f32 %v54, %v242
  %v244 = vpop.f32.mrf.mxu0
  %v245 = vpop.f32.mrf.mxu0
  %v246 = vadd.f32 %v54, %v245
  %v247 = vpop.f32.mrf.mxu0
  %248 = vdwg.mxu0
  %249 = vst [vmem:[%s3] sm:$0xff] %v187
  %250 = vst [vmem:[%s3 + $0x8] sm:$0xff] %v190
  %251 = vst [vmem:[%s3 + $0x10] sm:$0xff] %v195
  %252 = vst [vmem:[%s3 + $0x18] sm:$0xff] %v198
  %253 = vst [vmem:[%s3 + $0x20] sm:$0xff] %v203
  %254 = vst [vmem:[%s3 + $0x28] sm:$0xff] %v206
  %255 = vst [vmem:[%s3 + $0x30] sm:$0xff] %v211
  %256 = vst [vmem:[%s3 + $0x38] sm:$0xff] %v214
  %257 = vst [vmem:[%s3 + $0x40] sm:$0xff] %v219
  %258 = vst [vmem:[%s3 + $0x48] sm:$0xff] %v222
  %259 = vst [vmem:[%s3 + $0x50] sm:$0xff] %v227
  %260 = vst [vmem:[%s3 + $0x58] sm:$0xff] %v230
  %261 = vst [vmem:[%s3 + $0x60] sm:$0xff] %v235
  %262 = vst [vmem:[%s3 + $0x68] sm:$0xff] %v238
  %263 = vst [vmem:[%s3 + $0x70] sm:$0xff] %v243
  %264 = vst [vmem:[%s3 + $0x78] sm:$0xff] %v246
  %v265 = vadd.f32 %v187, %v190
  %v266 = vadd.f32 %v265, %v195
  %v267 = vadd.f32 %v266, %v198
  %v268 = vadd.f32 %v267, %v203
  %v269 = vadd.f32 %v268, %v206
  %v270 = vadd.f32 %v269, %v211
  %v271 = vadd.f32 %v270, %v214
  %v272 = vadd.f32 %v271, %v219
  %v273 = vadd.f32 %v272, %v222
  %v274 = vadd.f32 %v273, %v227
  %v275 = vadd.f32 %v274, %v230
  %v276 = vadd.f32 %v275, %v235
  %v277 = vadd.f32 %v276, %v238
  %v278 = vadd.f32 %v277, %v243
  %v279 = vadd.f32 %v278, %v246
  %v280 = vrot.slane %v279, 4
  %v281 = vadd.f32 %v279, %v280
  %v282 = vrot.slane %v281, 2
  %v283 = vadd.f32 %v281, %v282
  %v284 = vrot.slane %v283, 1
  %v285 = vadd.f32 %v283, %v284
  %286 = vst [vmem:[%s4] sm:$0x1] %v285
  %v287 = vmul.f32 %v187, %v187
  %v288 = vmul.f32 %v190, %v190
  %v289 = vmul.f32 %v195, %v195
  %v290 = vmul.f32 %v198, %v198
  %v291 = vmul.f32 %v203, %v203
  %v292 = vmul.f32 %v206, %v206
  %v293 = vmul.f32 %v211, %v211
  %v294 = vmul.f32 %v214, %v214
  %v295 = vmul.f32 %v219, %v219
  %v296 = vmul.f32 %v222, %v222
  %v297 = vmul.f32 %v227, %v227
  %v298 = vmul.f32 %v230, %v230
  %v299 = vmul.f32 %v235, %v235
  %v300 = vmul.f32 %v238, %v238
  %v301 = vmul.f32 %v243, %v243
  %v302 = vmul.f32 %v246, %v246
  %v303 = vadd.f32 %v287, %v288
  %v304 = vadd.f32 %v303, %v289
  %v305 = vadd.f32 %v304, %v290
  %v306 = vadd.f32 %v305, %v291
  %v307 = vadd.f32 %v306, %v292
  %v308 = vadd.f32 %v307, %v293
  %v309 = vadd.f32 %v308, %v294
  %v310 = vadd.f32 %v309, %v295
  %v311 = vadd.f32 %v310, %v296
  %v312 = vadd.f32 %v311, %v297
  %v313 = vadd.f32 %v312, %v298
  %v314 = vadd.f32 %v313, %v299
  %v315 = vadd.f32 %v314, %v300
  %v316 = vadd.f32 %v315, %v301
  %v317 = vadd.f32 %v316, %v302
  %v318 = vrot.slane %v317, 4
  %v319 = vadd.f32 %v317, %v318
  %v320 = vrot.slane %v319, 2
  %v321 = vadd.f32 %v319, %v320
  %v322 = vrot.slane %v321, 1
  %v323 = vadd.f32 %v321, %v322
  %324 = vst [vmem:[%s4 + $0x1] sm:$0x1] %v323
  %325 = vst [vmem:[%s4 + $0x2] sm:$0x3f] 0.0
  // Predicated region
  $region14: #{fwd.5} parent=0 // pred_check
    _
  $region15: #{fwd.5} parent=0 // pred_check_branch
    %327 = sbr.rel (0) target = $region17
  $region16: #{fwd.5} parent=0 // pred_region
    _
  $region17: #{fwd.5} parent=0 // pred_fallthru
    _
  // Predicated region
  $region18: #{fwd.5} parent=0 // pred_check
    _
  $region19: #{fwd.5} parent=0 // pred_check_branch
    %329 = sbr.rel (0) target = $region21
  $region20: #{fwd.5} parent=0 // pred_region
    _
  $region21: #{fwd.5} parent=0 // pred_fallthru
    _
  // Predicated region
  $region22: #{fwd.5} parent=0 // pred_check
    _
  $region23: #{fwd.5} parent=0 // pred_check_branch
    %331 = sbr.rel (0) target = $region25
  $region24: #{fwd.5} parent=0 // pred_region
    _
  $region25: #{fwd.5} parent=0 // pred_fallthru
    _
  // Predicated region
  $region26: #{fwd.5} parent=0 // pred_check
    _
  $region27: #{fwd.5} parent=0 // pred_check_branch
    %333 = sbr.rel (0) target = $region29
  $region28: #{fwd.5} parent=0 // pred_region
    _
  $region29: #{fwd.5} parent=0 // pred_fallthru
    _

// kernel: fwd.6
$region0: #{fwd.6}
  #allocation0 [shape = 'u32[]', space=smem, size = 0x4, offset = 0x4, fixed_abs, tag = 'smem constant byte address 0x4 - core index']
  #allocation1 [shape = 'u32[144,128]{1,0:T(1,128)}', space=vmem, size = 0x12000, scoped, tag = 'internal scratch']
  %s0 = inlined_call_operand.vmem [shape: f32[128,128], index: 0, kind: input, shape index: {}, may-alias: {0,3}]
  %s1 = inlined_call_operand.vmem [shape: f32[1,128], index: 1, kind: input, shape index: {}]
  %s2 = inlined_call_operand.vmem [shape: f32[1,128], index: 2, kind: input, shape index: {}]
  %s3 = inlined_call_operand.vmem [shape: f32[128,128], index: 3, kind: output, shape index: {}, may-alias: {0,3}]
  %s4 = sld [smem:[#allocation0]]
  $region22: #{fwd.6} parent=0
    _
  %s6 = ssub.s32 1, %s4
  %s7 = scalar_select 0, %s6, %s4
  // Predicated region
  $region2: #{fwd.6} parent=0 // pred_check
    _
  $region3: #{fwd.6} parent=0 // pred_check_branch
    %9 = sbr.rel (0) target = $region5
  $region4: #{fwd.6} parent=0 // pred_region
    _
  $region5: #{fwd.6} parent=0 // pred_fallthru
    _
  // Predicated region
  $region6: #{fwd.6} parent=0 // pred_check
    _
  $region7: #{fwd.6} parent=0 // pred_check_branch
    %11 = sbr.rel (0) target = $region9
  $region8: #{fwd.6} parent=0 // pred_region
    _
  $region9: #{fwd.6} parent=0 // pred_fallthru
    _
  // Predicated region
  $region10: #{fwd.6} parent=0 // pred_check
    _
  $region11: #{fwd.6} parent=0 // pred_check_branch
    %13 = sbr.rel (0) target = $region13
  $region12: #{fwd.6} parent=0 // pred_region
    _
  $region13: #{fwd.6} parent=0 // pred_fallthru
    _
  %v14 = vld [vmem:[%s0] sm:$0xff]
  %v15 = vld [vmem:[%s0 + $0x8] sm:$0xff]
  %v16 = vld [vmem:[%s0 + $0x10] sm:$0xff]
  %v17 = vld [vmem:[%s0 + $0x18] sm:$0xff]
  %v18 = vld [vmem:[%s0 + $0x20] sm:$0xff]
  %v19 = vld [vmem:[%s0 + $0x28] sm:$0xff]
  %v20 = vld [vmem:[%s0 + $0x30] sm:$0xff]
  %v21 = vld [vmem:[%s0 + $0x38] sm:$0xff]
  %v22 = vld [vmem:[%s0 + $0x40] sm:$0xff]
  %v23 = vld [vmem:[%s0 + $0x48] sm:$0xff]
  %v24 = vld [vmem:[%s0 + $0x50] sm:$0xff]
  %v25 = vld [vmem:[%s0 + $0x58] sm:$0xff]
  %v26 = vld [vmem:[%s0 + $0x60] sm:$0xff]
  %v27 = vld [vmem:[%s0 + $0x68] sm:$0xff]
  %v28 = vld [vmem:[%s0 + $0x70] sm:$0xff]
  %v29 = vld [vmem:[%s0 + $0x78] sm:$0xff]
  %v30 = vld [vmem:[%s1] sm:$0x1]
  %v32 = vlaneseq
  %v33 = vshrl.u32 %v32, 7
  %v34 = vsub.s32 0, %v33
  %v35 = vrot.slane %v30, %v34
  %v37 = vmul.f32 %v14, %v35
  %v38 = vmul.f32 %v15, %v35
  %v39 = vmul.f32 %v16, %v35
  %v40 = vmul.f32 %v17, %v35
  %v41 = vmul.f32 %v18, %v35
  %v42 = vmul.f32 %v19, %v35
  %v43 = vmul.f32 %v20, %v35
  %v44 = vmul.f32 %v21, %v35
  %v45 = vmul.f32 %v22, %v35
  %v46 = vmul.f32 %v23, %v35
  %v47 = vmul.f32 %v24, %v35
  %v48 = vmul.f32 %v25, %v35
  %v49 = vmul.f32 %v26, %v35
  %v50 = vmul.f32 %v27, %v35
  %v51 = vmul.f32 %v28, %v35
  %v52 = vmul.f32 %v29, %v35
  %v53 = vld [vmem:[%s2] sm:$0x1]
  %v55 = vlaneseq
  %v56 = vshrl.u32 %v55, 7
  %v57 = vsub.s32 0, %v56
  %v58 = vrot.slane %v53, %v57
  %v60 = vadd.f32 %v37, %v58
  %v61 = vadd.f32 %v38, %v58
  %v62 = vadd.f32 %v39, %v58
  %v63 = vadd.f32 %v40, %v58
  %v64 = vadd.f32 %v41, %v58
  %v65 = vadd.f32 %v42, %v58
  %v66 = vadd.f32 %v43, %v58
  %v67 = vadd.f32 %v44, %v58
  %v68 = vadd.f32 %v45, %v58
  %v69 = vadd.f32 %v46, %v58
  %v70 = vadd.f32 %v47, %v58
  %v71 = vadd.f32 %v48, %v58
  %v72 = vadd.f32 %v49, %v58
  %v73 = vadd.f32 %v50, %v58
  %v74 = vadd.f32 %v51, %v58
  %v75 = vadd.f32 %v52, %v58
  %vm76 = vcmp.ge.f32.partialorder %v60, 0.0
  %vm77 = vcmp.ge.f32.partialorder %v61, 0.0
  %vm78 = vcmp.ge.f32.partialorder %v62, 0.0
  %vm79 = vcmp.ge.f32.partialorder %v63, 0.0
  %vm80 = vcmp.ge.f32.partialorder %v64, 0.0
  %vm81 = vcmp.ge.f32.partialorder %v65, 0.0
  %vm82 = vcmp.ge.f32.partialorder %v66, 0.0
  %vm83 = vcmp.ge.f32.partialorder %v67, 0.0
  %vm84 = vcmp.ge.f32.partialorder %v68, 0.0
  %vm85 = vcmp.ge.f32.partialorder %v69, 0.0
  %vm86 = vcmp.ge.f32.partialorder %v70, 0.0
  %vm87 = vcmp.ge.f32.partialorder %v71, 0.0
  %vm88 = vcmp.ge.f32.partialorder %v72, 0.0
  %vm89 = vcmp.ge.f32.partialorder %v73, 0.0
  %vm90 = vcmp.ge.f32.partialorder %v74, 0.0
  %vm91 = vcmp.ge.f32.partialorder %v75, 0.0
  %v92 = vmul.f32 %v60, 0.01
  %v93 = vmul.f32 %v61, 0.01
  %v94 = vmul.f32 %v62, 0.01
  %v95 = vmul.f32 %v63, 0.01
  %v96 = vmul.f32 %v64, 0.01
  %v97 = vmul.f32 %v65, 0.01
  %v98 = vmul.f32 %v66, 0.01
  %v99 = vmul.f32 %v67, 0.01
  %v100 = vmul.f32 %v68, 0.01
  %v101 = vmul.f32 %v69, 0.01
  %v102 = vmul.f32 %v70, 0.01
  %v103 = vmul.f32 %v71, 0.01
  %v104 = vmul.f32 %v72, 0.01
  %v105 = vmul.f32 %v73, 0.01
  %v106 = vmul.f32 %v74, 0.01
  %v107 = vmul.f32 %v75, 0.01
  %v108 = vsel %vm76, %v60, %v92
  %v109 = vsel %vm77, %v61, %v93
  %v110 = vsel %vm78, %v62, %v94
  %v111 = vsel %vm79, %v63, %v95
  %v112 = vsel %vm80, %v64, %v96
  %v113 = vsel %vm81, %v65, %v97
  %v114 = vsel %vm82, %v66, %v98
  %v115 = vsel %vm83, %v67, %v99
  %v116 = vsel %vm84, %v68, %v100
  %v117 = vsel %vm85, %v69, %v101
  %v118 = vsel %vm86, %v70, %v102
  %v119 = vsel %vm87, %v71, %v103
  %v120 = vsel %vm88, %v72, %v104
  %v121 = vsel %vm89, %v73, %v105
  %v122 = vsel %vm90, %v74, %v106
  %v123 = vsel %vm91, %v75, %v107
  %124 = vst [vmem:[%s3] sm:$0xff] %v108
  %125 = vst [vmem:[%s3 + $0x8] sm:$0xff] %v109
  %126 = vst [vmem:[%s3 + $0x10] sm:$0xff] %v110
  %127 = vst [vmem:[%s3 + $0x18] sm:$0xff] %v111
  %128 = vst [vmem:[%s3 + $0x20] sm:$0xff] %v112
  %129 = vst [vmem:[%s3 + $0x28] sm:$0xff] %v113
  %130 = vst [vmem:[%s3 + $0x30] sm:$0xff] %v114
  %131 = vst [vmem:[%s3 + $0x38] sm:$0xff] %v115
  %132 = vst [vmem:[%s3 + $0x40] sm:$0xff] %v116
  %133 = vst [vmem:[%s3 + $0x48] sm:$0xff] %v117
  %134 = vst [vmem:[%s3 + $0x50] sm:$0xff] %v118
  %135 = vst [vmem:[%s3 + $0x58] sm:$0xff] %v119
  %136 = vst [vmem:[%s3 + $0x60] sm:$0xff] %v120
  %137 = vst [vmem:[%s3 + $0x68] sm:$0xff] %v121
  %138 = vst [vmem:[%s3 + $0x70] sm:$0xff] %v122
  %139 = vst [vmem:[%s3 + $0x78] sm:$0xff] %v123
  // Predicated region
  $region14: #{fwd.6} parent=0 // pred_check
    _
  $region15: #{fwd.6} parent=0 // pred_check_branch
    %141 = sbr.rel (0) target = $region17
  $region16: #{fwd.6} parent=0 // pred_region
    _
  $region17: #{fwd.6} parent=0 // pred_fallthru
    _
  // Predicated region
  $region18: #{fwd.6} parent=0 // pred_check
    _
  $region19: #{fwd.6} parent=0 // pred_check_branch
    %143 = sbr.rel (0) target = $region21
  $region20: #{fwd.6} parent=0 // pred_region
    _
  $region21: #{fwd.6} parent=0 // pred_fallthru
    _

// kernel: fwd.8
$region0: #{fwd.8}
  #allocation0 [shape = 'u32[]', space=smem, size = 0x4, offset = 0x4, fixed_abs, tag = 'smem constant byte address 0x4 - core index']
  #allocation1 [shape = 'u32[144,128]{1,0:T(1,128)}', space=vmem, size = 0x12000, scoped, tag = 'internal scratch']
  %s0 = inlined_call_operand.vmem [shape: f32[32,128], index: 0, kind: input, shape index: {}, may-alias: {0,3}]
  %s1 = inlined_call_operand.vmem [shape: f32[1,128], index: 1, kind: input, shape index: {}]
  %s2 = inlined_call_operand.vmem [shape: f32[1,128], index: 2, kind: input, shape index: {}]
  %s3 = inlined_call_operand.vmem [shape: f32[32,128], index: 3, kind: output, shape index: {}, may-alias: {0,3}]
  %s4 = sld [smem:[#allocation0]]
  $region22: #{fwd.8} parent=0
    _
  %s6 = ssub.s32 1, %s4
  %s7 = scalar_select 0, %s6, %s4
  // Predicated region
  $region2: #{fwd.8} parent=0 // pred_check
    _
  $region3: #{fwd.8} parent=0 // pred_check_branch
    %9 = sbr.rel (0) target = $region5
  $region4: #{fwd.8} parent=0 // pred_region
    _
  $region5: #{fwd.8} parent=0 // pred_fallthru
    _
  // Predicated region
  $region6: #{fwd.8} parent=0 // pred_check
    _
  $region7: #{fwd.8} parent=0 // pred_check_branch
    %11 = sbr.rel (0) target = $region9
  $region8: #{fwd.8} parent=0 // pred_region
    _
  $region9: #{fwd.8} parent=0 // pred_fallthru
    _
  // Predicated region
  $region10: #{fwd.8} parent=0 // pred_check
    _
  $region11: #{fwd.8} parent=0 // pred_check_branch
    %13 = sbr.rel (0) target = $region13
  $region12: #{fwd.8} parent=0 // pred_region
    _
  $region13: #{fwd.8} parent=0 // pred_fallthru
    _
  %v14 = vld [vmem:[%s0] sm:$0xff]
  %v15 = vld [vmem:[%s0 + $0x8] sm:$0xff]
  %v16 = vld [vmem:[%s0 + $0x10] sm:$0xff]
  %v17 = vld [vmem:[%s0 + $0x18] sm:$0xff]
  %v18 = vld [vmem:[%s1] sm:$0x1]
  %v20 = vlaneseq
  %v21 = vshrl.u32 %v20, 7
  %v22 = vsub.s32 0, %v21
  %v23 = vrot.slane %v18, %v22
  %v25 = vmul.f32 %v14, %v23
  %v26 = vmul.f32 %v15, %v23
  %v27 = vmul.f32 %v16, %v23
  %v28 = vmul.f32 %v17, %v23
  %v29 = vld [vmem:[%s2] sm:$0x1]
  %v31 = vlaneseq
  %v32 = vshrl.u32 %v31, 7
  %v33 = vsub.s32 0, %v32
  %v34 = vrot.slane %v29, %v33
  %v36 = vadd.f32 %v25, %v34
  %v37 = vadd.f32 %v26, %v34
  %v38 = vadd.f32 %v27, %v34
  %v39 = vadd.f32 %v28, %v34
  %vm40 = vcmp.ge.f32.partialorder %v36, 0.0
  %vm41 = vcmp.ge.f32.partialorder %v37, 0.0
  %vm42 = vcmp.ge.f32.partialorder %v38, 0.0
  %vm43 = vcmp.ge.f32.partialorder %v39, 0.0
  %v44 = vmul.f32 %v36, 0.01
  %v45 = vmul.f32 %v37, 0.01
  %v46 = vmul.f32 %v38, 0.01
  %v47 = vmul.f32 %v39, 0.01
  %v48 = vsel %vm40, %v36, %v44
  %v49 = vsel %vm41, %v37, %v45
  %v50 = vsel %vm42, %v38, %v46
  %v51 = vsel %vm43, %v39, %v47
  %52 = vst [vmem:[%s3] sm:$0xff] %v48
  %53 = vst [vmem:[%s3 + $0x8] sm:$0xff] %v49
  %54 = vst [vmem:[%s3 + $0x10] sm:$0xff] %v50
  %55 = vst [vmem:[%s3 + $0x18] sm:$0xff] %v51
  // Predicated region
  $region14: #{fwd.8} parent=0 // pred_check
    _
  $region15: #{fwd.8} parent=0 // pred_check_branch
    %57 = sbr.rel (0) target = $region17
  $region16: #{fwd.8} parent=0 // pred_region
    _
  $region17: #{fwd.8} parent=0 // pred_fallthru
    _
  // Predicated region
  $region18: #{fwd.8} parent=0 // pred_check
    _
  $region19: #{fwd.8} parent=0 // pred_check_branch
    %59 = sbr.rel (0) target = $region21
  $region20: #{fwd.8} parent=0 // pred_region
    _
  $region21: #{fwd.8} parent=0 // pred_fallthru
    _

// kernel: fwd.7
$region0: #{fwd.7}
  #allocation0 [shape = 'u32[]', space=smem, size = 0x4, offset = 0x4, fixed_abs, tag = 'smem constant byte address 0x4 - core index']
  #allocation1 [shape = 'u32[144,128]{1,0:T(1,128)}', space=vmem, size = 0x12000, scoped, tag = 'internal scratch']
  %s0 = inlined_call_operand.vmem [shape: bf16[32,128], index: 0, kind: input, shape index: {}]
  %s1 = inlined_call_operand.vmem [shape: bf16[128,128], index: 1, kind: input, shape index: {}]
  %s2 = inlined_call_operand.vmem [shape: f32[1,128], index: 2, kind: input, shape index: {}]
  %s3 = inlined_call_operand.vmem [shape: f32[32,128], index: 3, kind: output, shape index: {0}]
  %s4 = inlined_call_operand.vmem [shape: f32[8,128], index: 4, kind: output, shape index: {1}]
  %5 = xla_tuple %s3, %s4
  %s6 = sld [smem:[#allocation0]]
  $region30: #{fwd.7} parent=0
    _
  %s8 = ssub.s32 1, %s6
  %s9 = scalar_select 0, %s8, %s6
  // Predicated region
  $region2: #{fwd.7} parent=0 // pred_check
    _
  $region3: #{fwd.7} parent=0 // pred_check_branch
    %11 = sbr.rel (0) target = $region5
  $region4: #{fwd.7} parent=0 // pred_region
    _
  $region5: #{fwd.7} parent=0 // pred_fallthru
    _
  // Predicated region
  $region6: #{fwd.7} parent=0 // pred_check
    _
  $region7: #{fwd.7} parent=0 // pred_check_branch
    %13 = sbr.rel (0) target = $region9
  $region8: #{fwd.7} parent=0 // pred_region
    _
  $region9: #{fwd.7} parent=0 // pred_fallthru
    _
  // Predicated region
  $region10: #{fwd.7} parent=0 // pred_check
    _
  $region11: #{fwd.7} parent=0 // pred_check_branch
    %15 = sbr.rel (0) target = $region13
  $region12: #{fwd.7} parent=0 // pred_region
    _
  $region13: #{fwd.7} parent=0 // pred_fallthru
    _
  %v17 = vld [vmem:[%s0] sm:$0xf]
  %v18 = vld [vmem:[%s0 + $0x4] sm:$0xf]
  %v19 = vld [vmem:[%s0 + $0x8] sm:$0xf]
  %v20 = vld [vmem:[%s0 + $0xc] sm:$0xf]
  %v21 = vld [vmem:[%s1] sm:$0xf]
  %v22 = vld [vmem:[%s1 + $0x4] sm:$0xf]
  %v23 = vld [vmem:[%s1 + $0x8] sm:$0xf]
  %v24 = vld [vmem:[%s1 + $0xc] sm:$0xf]
  %v25 = vld [vmem:[%s1 + $0x10] sm:$0xf]
  %v26 = vld [vmem:[%s1 + $0x14] sm:$0xf]
  %v27 = vld [vmem:[%s1 + $0x18] sm:$0xf]
  %v28 = vld [vmem:[%s1 + $0x1c] sm:$0xf]
  %v29 = vld [vmem:[%s1 + $0x20] sm:$0xf]
  %v30 = vld [vmem:[%s1 + $0x24] sm:$0xf]
  %v31 = vld [vmem:[%s1 + $0x28] sm:$0xf]
  %v32 = vld [vmem:[%s1 + $0x2c] sm:$0xf]
  %v33 = vld [vmem:[%s1 + $0x30] sm:$0xf]
  %v34 = vld [vmem:[%s1 + $0x34] sm:$0xf]
  %v35 = vld [vmem:[%s1 + $0x38] sm:$0xf]
  %v36 = vld [vmem:[%s1 + $0x3c] sm:$0xf]
  %v37 = vld [vmem:[%s2] sm:$0x1]
  %v39 = vlaneseq
  %v40 = vshrl.u32 %v39, 7
  %v41 = vsub.s32 0, %v40
  %v42 = vrot.slane %v37, %v41
  %v48 = vunpack.c.l.b16 %v17
  %v49 = vunpack.c.l.b16 %v18
  %v50 = vunpack.c.l.b16 %v19
  %v51 = vunpack.c.l.b16 %v20
  %v52 = vpack.c.b16 %v49, %v48
  %v53 = vpack.c.b16 %v51, %v50
  %v72 = vunpack.c.l.b16 %v21
  %v73 = vunpack.c.l.b16 %v22
  %v74 = vunpack.c.l.b16 %v23
  %v75 = vunpack.c.l.b16 %v24
  %v76 = vunpack.c.l.b16 %v25
  %v77 = vunpack.c.l.b16 %v26
  %v78 = vunpack.c.l.b16 %v27
  %v79 = vunpack.c.l.b16 %v28
  %v80 = vunpack.c.l.b16 %v29
  %v81 = vunpack.c.l.b16 %v30
  %v82 = vunpack.c.l.b16 %v31
  %v83 = vunpack.c.l.b16 %v32
  %v84 = vunpack.c.l.b16 %v33
  %v85 = vunpack.c.l.b16 %v34
  %v86 = vunpack.c.l.b16 %v35
  %v87 = vunpack.c.l.b16 %v36
  %v88 = vpack.c.b16 %v73, %v72
  %v89 = vpack.c.b16 %v75, %v74
  %v90 = vpack.c.b16 %v77, %v76
  %v91 = vpack.c.b16 %v79, %v78
  %v92 = vpack.c.b16 %v81, %v80
  %v93 = vpack.c.b16 %v83, %v82
  %v94 = vpack.c.b16 %v85, %v84
  %v95 = vpack.c.b16 %v87, %v86
  %104 = vmatprep.subr.bf16.mxu0 0
  %105 = vmatpush1.bf16.msra.mxu0 %v95
  %106 = vmatprep.subr.bf16.mxu0 0
  %107 = vmatpush1.bf16.msra.mxu0 %v94
  %108 = vmatprep.subr.bf16.mxu0 0
  %109 = vmatpush1.bf16.msra.mxu0 %v93
  %110 = vmatprep.subr.bf16.mxu0 0
  %111 = vmatpush1.bf16.msra.mxu0 %v92
  %112 = vmatprep.subr.bf16.mxu0 0
  %113 = vmatpush1.bf16.msra.mxu0 %v91
  %114 = vmatprep.subr.bf16.mxu0 0
  %115 = vmatpush1.bf16.msra.mxu0 %v90
  %116 = vmatprep.subr.bf16.mxu0 0
  %117 = vmatpush1.bf16.msra.mxu0 %v89
  %118 = vmatprep.subr.bf16.mxu0 0
  %119 = vmatpush1.bf16.msra.mxu0 %v88
  %120 = vmatprep.subr.bf16.mxu0 0
  %121 = vmatpush2.bf16.msra.mxu0 0
  %122 = vmatprep.subr.bf16.mxu0 0
  %123 = vmatpush2.bf16.msra.mxu0 0
  %124 = vmatprep.subr.bf16.mxu0 0
  %125 = vmatpush2.bf16.msra.mxu0 0
  %126 = vmatprep.subr.bf16.mxu0 0
  %127 = vmatpush2.bf16.msra.mxu0 0
  %128 = vmatprep.subr.bf16.mxu0 0
  %129 = vmatpush2.bf16.msra.mxu0 0
  %130 = vmatprep.subr.bf16.mxu0 0
  %131 = vmatpush2.bf16.msra.mxu0 0
  %132 = vmatprep.subr.bf16.mxu0 0
  %133 = vmatpush2.bf16.msra.mxu0 0
  %134 = vmatprep.subr.bf16.mxu0 0
  %135 = vmatpush2.bf16.msra.mxu0 0
  %136 = vmatprep.mubr.bf16.mxu0 0
  %137 = vmatmul.mubr.bf16.gmra.mxu0 %v52
  %v138 = vpop.f32.mrf.mxu0
  %v139 = vadd.f32 %v42, %v138
  %v140 = vpop.f32.mrf.mxu0
  %v141 = vpop.f32.mrf.mxu0
  %v142 = vadd.f32 %v42, %v141
  %v143 = vpop.f32.mrf.mxu0
  %144 = vmatprep.mubr.bf16.mxu0 0
  %145 = vmatmul.mubr.bf16.gmra.mxu0 %v53
  %v146 = vpop.f32.mrf.mxu0
  %v147 = vadd.f32 %v42, %v146
  %v148 = vpop.f32.mrf.mxu0
  %v149 = vpop.f32.mrf.mxu0
  %v150 = vadd.f32 %v42, %v149
  %v151 = vpop.f32.mrf.mxu0
  %152 = vdwg.mxu0
  %153 = vst [vmem:[%s3] sm:$0xff] %v139
  %154 = vst [vmem:[%s3 + $0x8] sm:$0xff] %v142
  %155 = vst [vmem:[%s3 + $0x10] sm:$0xff] %v147
  %156 = vst [vmem:[%s3 + $0x18] sm:$0xff] %v150
  %v157 = vadd.f32 %v139, %v142
  %v158 = vadd.f32 %v157, %v147
  %v159 = vadd.f32 %v158, %v150
  %v160 = vrot.slane %v159, 4
  %v161 = vadd.f32 %v159, %v160
  %v162 = vrot.slane %v161, 2
  %v163 = vadd.f32 %v161, %v162
  %v164 = vrot.slane %v163, 1
  %v165 = vadd.f32 %v163, %v164
  %166 = vst [vmem:[%s4] sm:$0x1] %v165
  %v167 = vmul.f32 %v139, %v139
  %v168 = vmul.f32 %v142, %v142
  %v169 = vmul.f32 %v147, %v147
  %v170 = vmul.f32 %v150, %v150
  %v171 = vadd.f32 %v167, %v168
  %v172 = vadd.f32 %v171, %v169
  %v173 = vadd.f32 %v172, %v170
  %v174 = vrot.slane %v173, 4
  %v175 = vadd.f32 %v173, %v174
  %v176 = vrot.slane %v175, 2
  %v177 = vadd.f32 %v175, %v176
  %v178 = vrot.slane %v177, 1
  %v179 = vadd.f32 %v177, %v178
  %180 = vst [vmem:[%s4 + $0x1] sm:$0x1] %v179
  %181 = vst [vmem:[%s4 + $0x2] sm:$0x3f] 0.0
  // Predicated region
  $region14: #{fwd.7} parent=0 // pred_check
    _
  $region15: #{fwd.7} parent=0 // pred_check_branch
    %183 = sbr.rel (0) target = $region17
  $region16: #{fwd.7} parent=0 // pred_region
    _
  $region17: #{fwd.7} parent=0 // pred_fallthru
    _
  // Predicated region
  $region18: #{fwd.7} parent=0 // pred_check
    _
  $region19: #{fwd.7} parent=0 // pred_check_branch
    %185 = sbr.rel (0) target = $region21
  $region20: #{fwd.7} parent=0 // pred_region
    _
  $region21: #{fwd.7} parent=0 // pred_fallthru
    _
  // Predicated region
  $region22: #{fwd.7} parent=0 // pred_check
    _
  $region23: #{fwd.7} parent=0 // pred_check_branch
    %187 = sbr.rel (0) target = $region25
  $region24: #{fwd.7} parent=0 // pred_region
    _
  $region25: #{fwd.7} parent=0 // pred_fallthru
    _
  // Predicated region
  $region26: #{fwd.7} parent=0 // pred_check
    _
  $region27: #{fwd.7} parent=0 // pred_check_branch
    %189 = sbr.rel (0) target = $region29
  $region28: #{fwd.7} parent=0 // pred_region
    _
  $region29: #{fwd.7} parent=0 // pred_fallthru
    _

// kernel: fwd.9
$region0: #{fwd.9}
  #allocation0 [shape = 'u32[]', space=smem, size = 0x4, offset = 0x4, fixed_abs, tag = 'smem constant byte address 0x4 - core index']
  #allocation1 [shape = 'u32[144,128]{1,0:T(1,128)}', space=vmem, size = 0x12000, scoped, tag = 'internal scratch']
  %s0 = inlined_call_operand.vmem [shape: bf16[8,256], index: 0, kind: input, shape index: {}]
  %s1 = inlined_call_operand.vmem [shape: bf16[256,128], index: 1, kind: input, shape index: {}]
  %s2 = inlined_call_operand.vmem [shape: f32[1,128], index: 2, kind: input, shape index: {}]
  %s3 = inlined_call_operand.hbm [shape: f32[8,128], index: 3, kind: output, shape index: {}]
  %s4 = sld [smem:[#allocation0]]
  $region22: #{fwd.9} parent=0
    _
  %s6 = ssub.s32 1, %s4
  %s7 = scalar_select 0, %s6, %s4
  $region1: #{fwd.9} parent=0
    #allocation2 [shape = 'u8[4096]{0}', space=vmem, size = 0x1000, scoped, tag = 'output window, operand 0, single buffered']
    #allocation3 [shape = 's32[1]{0}', space=sflag, size = 0x4, scoped, tag = 'scoped memory for fwd.9']
    %8 = vsyncpa [#allocation3], 0
    // Predicated region
    $region2: #{fwd.9} parent=1 // pred_check
      _
    $region3: #{fwd.9} parent=1 // pred_check_branch
      %10 = sbr.rel (0) target = $region5
    $region4: #{fwd.9} parent=1 // pred_region
      _
    $region5: #{fwd.9} parent=1 // pred_fallthru
      _
    // Predicated region
    $region6: #{fwd.9} parent=1 // pred_check
      _
    $region7: #{fwd.9} parent=1 // pred_check_branch
      %12 = sbr.rel (0) target = $region9
    $region8: #{fwd.9} parent=1 // pred_region
      _
    $region9: #{fwd.9} parent=1 // pred_fallthru
      _
    // Predicated region
    $region10: #{fwd.9} parent=1 // pred_check
      _
    $region11: #{fwd.9} parent=1 // pred_check_branch
      %14 = sbr.rel (0) target = $region13
    $region12: #{fwd.9} parent=1 // pred_region
      _
    $region13: #{fwd.9} parent=1 // pred_fallthru
      _
    %v16 = vld [vmem:[%s0] sm:$0xff]
    %v17 = vld [vmem:[%s1] sm:$0xf]
    %v18 = vld [vmem:[%s1 + $0x4] sm:$0xf]
    %v19 = vld [vmem:[%s1 + $0x8] sm:$0xf]
    %v20 = vld [vmem:[%s1 + $0xc] sm:$0xf]
    %v21 = vld [vmem:[%s1 + $0x10] sm:$0xf]
    %v22 = vld [vmem:[%s1 + $0x14] sm:$0xf]
    %v23 = vld [vmem:[%s1 + $0x18] sm:$0xf]
    %v24 = vld [vmem:[%s1 + $0x1c] sm:$0xf]
    %v25 = vld [vmem:[%s1 + $0x20] sm:$0xf]
    %v26 = vld [vmem:[%s1 + $0x24] sm:$0xf]
    %v27 = vld [vmem:[%s1 + $0x28] sm:$0xf]
    %v28 = vld [vmem:[%s1 + $0x2c] sm:$0xf]
    %v29 = vld [vmem:[%s1 + $0x30] sm:$0xf]
    %v30 = vld [vmem:[%s1 + $0x34] sm:$0xf]
    %v31 = vld [vmem:[%s1 + $0x38] sm:$0xf]
    %v32 = vld [vmem:[%s1 + $0x3c] sm:$0xf]
    %v33 = vld [vmem:[%s1 + $0x40] sm:$0xf]
    %v34 = vld [vmem:[%s1 + $0x44] sm:$0xf]
    %v35 = vld [vmem:[%s1 + $0x48] sm:$0xf]
    %v36 = vld [vmem:[%s1 + $0x4c] sm:$0xf]
    %v37 = vld [vmem:[%s1 + $0x50] sm:$0xf]
    %v38 = vld [vmem:[%s1 + $0x54] sm:$0xf]
    %v39 = vld [vmem:[%s1 + $0x58] sm:$0xf]
    %v40 = vld [vmem:[%s1 + $0x5c] sm:$0xf]
    %v41 = vld [vmem:[%s1 + $0x60] sm:$0xf]
    %v42 = vld [vmem:[%s1 + $0x64] sm:$0xf]
    %v43 = vld [vmem:[%s1 + $0x68] sm:$0xf]
    %v44 = vld [vmem:[%s1 + $0x6c] sm:$0xf]
    %v45 = vld [vmem:[%s1 + $0x70] sm:$0xf]
    %v46 = vld [vmem:[%s1 + $0x74] sm:$0xf]
    %v47 = vld [vmem:[%s1 + $0x78] sm:$0xf]
    %v48 = vld [vmem:[%s1 + $0x7c] sm:$0xf]
    %v49 = vld [vmem:[%s2] sm:$0x1]
    %v51 = vlaneseq
    %v52 = vshrl.u32 %v51, 7
    %v53 = vsub.s32 0, %v52
    %v54 = vrot.slane %v49, %v53
    %v57 = vunpack.c.l.b16 %v16
    %v58 = vunpack.c.h.b16 %v16
    %v59 = vpack.c.b16 %v57, %v57
    %v60 = vpack.c.b16 %v58, %v58
    %v95 = vunpack.c.l.b16 %v17
    %v96 = vunpack.c.l.b16 %v18
    %v97 = vunpack.c.l.b16 %v19
    %v98 = vunpack.c.l.b16 %v20
    %v99 = vunpack.c.l.b16 %v21
    %v100 = vunpack.c.l.b16 %v22
    %v101 = vunpack.c.l.b16 %v23
    %v102 = vunpack.c.l.b16 %v24
    %v103 = vunpack.c.l.b16 %v25
    %v104 = vunpack.c.l.b16 %v26
    %v105 = vunpack.c.l.b16 %v27
    %v106 = vunpack.c.l.b16 %v28
    %v107 = vunpack.c.l.b16 %v29
    %v108 = vunpack.c.l.b16 %v30
    %v109 = vunpack.c.l.b16 %v31
    %v110 = vunpack.c.l.b16 %v32
    %v111 = vunpack.c.l.b16 %v33
    %v112 = vunpack.c.l.b16 %v34
    %v113 = vunpack.c.l.b16 %v35
    %v114 = vunpack.c.l.b16 %v36
    %v115 = vunpack.c.l.b16 %v37
    %v116 = vunpack.c.l.b16 %v38
    %v117 = vunpack.c.l.b16 %v39
    %v118 = vunpack.c.l.b16 %v40
    %v119 = vunpack.c.l.b16 %v41
    %v120 = vunpack.c.l.b16 %v42
    %v121 = vunpack.c.l.b16 %v43
    %v122 = vunpack.c.l.b16 %v44
    %v123 = vunpack.c.l.b16 %v45
    %v124 = vunpack.c.l.b16 %v46
    %v125 = vunpack.c.l.b16 %v47
    %v126 = vunpack.c.l.b16 %v48
    %v127 = vpack.c.b16 %v96, %v95
    %v128 = vpack.c.b16 %v98, %v97
    %v129 = vpack.c.b16 %v100, %v99
    %v130 = vpack.c.b16 %v102, %v101
    %v131 = vpack.c.b16 %v104, %v103
    %v132 = vpack.c.b16 %v106, %v105
    %v133 = vpack.c.b16 %v108, %v107
    %v134 = vpack.c.b16 %v110, %v109
    %v135 = vpack.c.b16 %v112, %v111
    %v136 = vpack.c.b16 %v114, %v113
    %v137 = vpack.c.b16 %v116, %v115
    %v138 = vpack.c.b16 %v118, %v117
    %v139 = vpack.c.b16 %v120, %v119
    %v140 = vpack.c.b16 %v122, %v121
    %v141 = vpack.c.b16 %v124, %v123
    %v142 = vpack.c.b16 %v126, %v125
    %159 = vmatprep.subr.bf16.mxu0 0
    %160 = vmatpush1.bf16.msra.mxu0 %v134
    %161 = vmatprep.subr.bf16.mxu0 0
    %162 = vmatpush1.bf16.msra.mxu0 %v133
    %163 = vmatprep.subr.bf16.mxu0 0
    %164 = vmatpush1.bf16.msra.mxu0 %v132
    %165 = vmatprep.subr.bf16.mxu0 0
    %166 = vmatpush1.bf16.msra.mxu0 %v131
    %167 = vmatprep.subr.bf16.mxu0 0
    %168 = vmatpush1.bf16.msra.mxu0 %v130
    %169 = vmatprep.subr.bf16.mxu0 0
    %170 = vmatpush1.bf16.msra.mxu0 %v129
    %171 = vmatprep.subr.bf16.mxu0 0
    %172 = vmatpush1.bf16.msra.mxu0 %v128
    %173 = vmatprep.subr.bf16.mxu0 0
    %174 = vmatpush1.bf16.msra.mxu0 %v127
    %175 = vmatprep.subr.bf16.mxu0 0
    %176 = vmatpush2.bf16.msra.mxu0 %v142
    %177 = vmatprep.subr.bf16.mxu0 0
    %178 = vmatpush2.bf16.msra.mxu0 %v141
    %179 = vmatprep.subr.bf16.mxu0 0
    %180 = vmatpush2.bf16.msra.mxu0 %v140
    %181 = vmatprep.subr.bf16.mxu0 0
    %182 = vmatpush2.bf16.msra.mxu0 %v139
    %183 = vmatprep.subr.bf16.mxu0 0
    %184 = vmatpush2.bf16.msra.mxu0 %v138
    %185 = vmatprep.subr.bf16.mxu0 0
    %186 = vmatpush2.bf16.msra.mxu0 %v137
    %187 = vmatprep.subr.bf16.mxu0 0
    %188 = vmatpush2.bf16.msra.mxu0 %v136
    %189 = vmatprep.subr.bf16.mxu0 0
    %190 = vmatpush2.bf16.msra.mxu0 %v135
    %191 = vmatprep.mubr.bf16.mxu0 %v60
    %192 = vmatmul.mubr.bf16.gmra.mxu0 %v59
    %v193 = vpop.f32.mrf.mxu0
    %v194 = vadd.f32 %v54, %v193
    %v195 = vpop.f32.mrf.mxu0
    %v196 = vpop.f32.mrf.mxu0
    %v197 = vpop.f32.mrf.mxu0
    %198 = vdwg.mxu0
    %199 = vst [vmem:[#allocation2] sm:$0xff] %v194
    // Predicated region
    $region14: #{fwd.9} parent=1 // pred_check
      _
    $region15: #{fwd.9} parent=1 // pred_check_branch
      %201 = sbr.rel (0) target = $region17
    $region16: #{fwd.9} parent=1 // pred_region
      %s203 = ssub.s32 128, 128
      %204 = vsyncadd [#allocation3], %s203
      %s206 = sshll.u32 [#allocation2], 4
      %s207 = int_to_ptr.vmem [resolvable:$true] %s206
      %209 = dma.vmem_to_hbm [thread:$0]  %s207, 128, %s3, [#allocation3]
    $region17: #{fwd.9} parent=1 // pred_fallthru
      _
    // Predicated region
    $region18: #{fwd.9} parent=1 // pred_check
      _
    $region19: #{fwd.9} parent=1 // pred_check_branch
      %211 = sbr.rel (0) target = $region21
    $region20: #{fwd.9} parent=1 // pred_region
      %212 = dma.done [#allocation3], 128
    $region21: #{fwd.9} parent=1 // pred_fallthru
      _
    %213 = vsyncpa [#allocation3], 1

</llo_original>
